<compile_context>
chip_gen: v5e
topology: v5e:2x2
jax: 0.10.0
libtpu: 0.0.40
codegen_flags: <defaults>
</compile_context>

<pallas_src>
import functools

import jax
import jax.numpy as jnp
from jax import lax
from jax.experimental import pallas as pl
from jax.experimental.pallas import tpu as pltpu


def _round_up(a: int, b: int) -> int:
    return ((a + b - 1) // b) * b


def _cdiv(a: int, b: int) -> int:
    return (a + b - 1) // b


def _vmem_capacity_bytes() -> int:
    """Generation-aware VMEM capacity (v5e/v6e: 128 MiB, v7x: 64 MiB)."""
    try:
        info = pltpu.get_tpu_info()
        cap = getattr(info, "vmem_capacity_bytes", None)
        if cap:
            return int(cap)
    except Exception:
        pass
    return 64 << 20  # conservative fallback (assume the smallest, v7x)


def _layer_norm_bf16(x_ref, gamma_ref, beta_ref, eps):
    """LayerNorm in f32 over the hidden axis (eps inside sqrt, like nn.LayerNorm)."""
    x = x_ref[...].astype(jnp.float32)                       # (tm, H)
    mean = jnp.mean(x, axis=-1, keepdims=True)
    centered = x - mean
    var = jnp.mean(centered * centered, axis=-1, keepdims=True)
    xn = centered * lax.rsqrt(var + eps)
    xn = xn * gamma_ref[...] + beta_ref[...]
    return x, xn.astype(jnp.bfloat16)


def _pwff_kernel_fused(x_ref, gamma_ref, beta_ref, w1_ref, b1_ref, w2_ref, b2_ref,
                       o_ref, *, eps: float):
    """Full-F single pass: no accumulator scratch, no zero-init / RMW passes."""
    x_f32, xn = _layer_norm_bf16(x_ref, gamma_ref, beta_ref, eps)
    # bf16 x bf16 -> f32 MXU matmuls.
    h = jnp.dot(xn, w1_ref[...], preferred_element_type=jnp.float32)
    h = jnp.maximum(h + b1_ref[...], 0.0)                    # (tm, F)
    # TODO(synk): dropout omitted (inference / eval mode -> identity); training parity
    # would need pltpu.prng_seed / pltpu.prng_random_bits in-kernel.
    y = jnp.dot(h.astype(jnp.bfloat16), w2_ref[...], preferred_element_type=jnp.float32)
    o_ref[...] = (y + b2_ref[...] + x_f32).astype(o_ref.dtype)


def _pwff_kernel_split(x_ref, gamma_ref, beta_ref, w1_ref, b1_ref, w2_ref, b2_ref,
                       o_ref, xn_ref, acc_ref, *, eps: float):
    """ff-sliced path: grid axis 1 tiles the ff dimension (reduction, f32 accumulator)."""
    j = pl.program_id(1)

    @pl.when(j == 0)
    def _():
        _, xn = _layer_norm_bf16(x_ref, gamma_ref, beta_ref, eps)
        xn_ref[...] = xn                                     # cached LN output (bf16)
        acc_ref[...] = jnp.zeros_like(acc_ref)

    h = jnp.dot(xn_ref[...], w1_ref[...], preferred_element_type=jnp.float32)
    h = jnp.maximum(h + b1_ref[...], 0.0)                    # (tm, tf)
    acc_ref[...] += jnp.dot(h.astype(jnp.bfloat16), w2_ref[...],
                            preferred_element_type=jnp.float32)

    @pl.when(j == pl.num_programs(1) - 1)
    def _():
        y = acc_ref[...] + b2_ref[...] + x_ref[...].astype(jnp.float32)
        o_ref[...] = y.astype(o_ref.dtype)


def _fused_plan_bytes(tm: int, H: int, F: int) -> int:
    w = 2 * H * F * 2                 # bf16 W1 + W2, single-buffered (grid-constant)
    io = 2 * 2 * tm * H * 4           # double-buffered x + out f32 tiles
    h_tmp = tm * F * (4 + 2)          # f32 intermediate + bf16 MXU copy
    misc = (F + 3 * H) * 4 * 2
    return w + io + h_tmp + misc


def _split_plan_bytes(tm: int, H: int, tf: int, F: int) -> int:
    w = 2 * (2 * H * tf * 2)          # double-buffered bf16 W1/W2 ff slices
    io = 2 * 2 * tm * H * 4           # double-buffered x + out f32 tiles
    scratch = tm * H * (4 + 2)        # f32 accumulator + bf16 xn cache
    h_tmp = tm * tf * (4 + 2)
    misc = (F + 3 * H) * 4 * 2
    return w + io + scratch + h_tmp + misc


def encoder_pwff(x, gamma, beta, w1, b1, w2, b2, *, eps=1e-6, tm=512):
    """x: (B, S, H) float32.  Returns (B, S, H).  Matches the PyTorch module in eval mode
    (the module uses LayerNorm eps=1e-6)."""
    B, S, H = x.shape
    F = w1.shape[1]
    M = B * S

    vmem_cap = _vmem_capacity_bytes()
    budget = int(vmem_cap * 0.70)     # planning budget; leave headroom for compiler temps

    # --- plan selection: prefer nf == 1 (full-F resident weights, DMA'd once) ----------
    full_tm = None
    for tm_try in sorted({tm, 512, 256, 128}, reverse=True):
        if _fused_plan_bytes(tm_try, H, F) <= budget:
            full_tm = tm_try
            break

    if full_tm is not None:
        tm_target, nf, tf = full_tm, 1, F
    else:
        # Weights cannot stay resident: stream ff slices.  Raise tm so the per-step
        # arithmetic intensity on the weight stream (~tm flops/byte) clears the
        # v6e/v7x HBM roofline (~675 flops/byte on v6e).
        tm_target = max(tm, 1024)
        tf = F
        while _split_plan_bytes(tm_target, H, tf, F) > budget:
            if tf % 2 == 0 and (tf // 2) % 128 == 0:   # keep tf a multiple of 128
                tf //= 2
            elif tm_target > 256:
                tm_target //= 2
            else:
                break
        nf = F // tf

    # --- balanced row tiles; guarantee >= 2 tiles so v7x's 2 TCs both get work ---------
    n_rt = max(1, _cdiv(M, tm_target))
    tm_eff = _round_up(_cdiv(M, n_rt), 8)
    if n_rt == 1 and tm_eff >= 16:
        n_rt = 2
        tm_eff = _round_up(_cdiv(M, 2), 8)
    M_pad = n_rt * tm_eff             # padded rows are computed and discarded (cheap)

    x2d = x.reshape(M, H)
    if M_pad != M:
        x2d = jnp.pad(x2d, ((0, M_pad - M), (0, 0)))

    gamma2d = gamma.reshape(1, H).astype(jnp.float32)
    beta2d = beta.reshape(1, H).astype(jnp.float32)
    b1_2d = b1.reshape(1, F).astype(jnp.float32)
    b2_2d = b2.reshape(1, H).astype(jnp.float32)
    # bf16 weights: MXU bf16 peak + half the VMEM/HBM footprint (accumulation stays f32).
    w1_bf = w1.astype(jnp.bfloat16)
    w2_bf = w2.astype(jnp.bfloat16)

    # --- VMEM limit: generation-aware ceiling, never below the computed requirement ----
    plan_bytes = (_fused_plan_bytes(tm_eff, H, F) if nf == 1
                  else _split_plan_bytes(tm_eff, H, tf, F))
    ceiling = max(32 << 20, int(vmem_cap * 0.80))   # ~51 MiB on v7x, ~102 MiB on v5e/v6e
    vmem_limit = int(min(max(plan_bytes + (8 << 20), 32 << 20), ceiling))
    vmem_limit = max(vmem_limit, plan_bytes)

    # --- advisory cost: account for per-row-tile weight re-streaming when nf > 1 -------
    weight_stream_factor = 1 if nf == 1 else n_rt
    cost = pl.CostEstimate(
        flops=4 * M_pad * H * F,                        # two matmuls (2 flops / MAC each)
        transcendentals=M_pad,                          # one rsqrt per row
        bytes_accessed=(2 * M_pad * H * 4               # x in + out
                        + weight_stream_factor * 2 * H * F * 2
                        + (F + 3 * H) * 4))

    const_buf = pl.Buffered(1)        # grid-constant blocks: single buffer, DMA'd once

    if nf == 1:
        out2d = pl.pallas_call(
            functools.partial(_pwff_kernel_fused, eps=eps),
            out_shape=jax.ShapeDtypeStruct((M_pad, H), x.dtype),
            grid_spec=pltpu.PrefetchScalarGridSpec(
                num_scalar_prefetch=0,
                grid=(n_rt,),
                in_specs=[
                    pl.BlockSpec((tm_eff, H), lambda i: (i, 0)),                       # x
                    pl.BlockSpec((1, H), lambda i: (0, 0), pipeline_mode=const_buf),   # gamma
                    pl.BlockSpec((1, H), lambda i: (0, 0), pipeline_mode=const_buf),   # beta
                    pl.BlockSpec((H, F), lambda i: (0, 0), pipeline_mode=const_buf),   # W1
                    pl.BlockSpec((1, F), lambda i: (0, 0), pipeline_mode=const_buf),   # b1
                    pl.BlockSpec((F, H), lambda i: (0, 0), pipeline_mode=const_buf),   # W2
                    pl.BlockSpec((1, H), lambda i: (0, 0), pipeline_mode=const_buf),   # b2
                ],
                out_specs=pl.BlockSpec((tm_eff, H), lambda i: (i, 0)),
            ),
            compiler_params=pltpu.CompilerParams(
                dimension_semantics=("parallel",),
                vmem_limit_bytes=vmem_limit,
            ),
            cost_estimate=cost,
        )(x2d, gamma2d, beta2d, w1_bf, b1_2d, w2_bf, b2_2d)
    else:
        # ff-sliced fallback (very large H*F only).  W1/b1/W2 slices keep the default
        # 2-deep pipeline; bump to pl.Buffered(3) if the weight DMA is still exposed.
        out2d = pl.pallas_call(
            functools.partial(_pwff_kernel_split, eps=eps),
            out_shape=jax.ShapeDtypeStruct((M_pad, H), x.dtype),
            grid_spec=pltpu.PrefetchScalarGridSpec(
                num_scalar_prefetch=0,
                grid=(n_rt, nf),
                in_specs=[
                    pl.BlockSpec((tm_eff, H), lambda i, j: (i, 0)),                      # x
                    pl.BlockSpec((1, H), lambda i, j: (0, 0), pipeline_mode=const_buf),  # gamma
                    pl.BlockSpec((1, H), lambda i, j: (0, 0), pipeline_mode=const_buf),  # beta
                    pl.BlockSpec((H, tf), lambda i, j: (0, j)),                          # W1 slice
                    pl.BlockSpec((1, tf), lambda i, j: (0, j)),                          # b1 slice
                    pl.BlockSpec((tf, H), lambda i, j: (j, 0)),                          # W2 slice
                    pl.BlockSpec((1, H), lambda i, j: (0, 0), pipeline_mode=const_buf),  # b2
                ],
                out_specs=pl.BlockSpec((tm_eff, H), lambda i, j: (i, 0)),
                scratch_shapes=[
                    pltpu.VMEM((tm_eff, H), jnp.bfloat16),   # cached LayerNorm output
                    pltpu.VMEM((tm_eff, H), jnp.float32),    # f32 output accumulator
                ],
            ),
            compiler_params=pltpu.CompilerParams(
                dimension_semantics=("parallel", "arbitrary"),
                vmem_limit_bytes=vmem_limit,
            ),
            cost_estimate=cost,
        )(x2d, gamma2d, beta2d, w1_bf, b1_2d, w2_bf, b2_2d)

    return out2d[:M].reshape(B, S, H)


def _reference(x, gamma, beta, w1, b1, w2, b2, eps=1e-6):
    mean = jnp.mean(x, axis=-1, keepdims=True)
    var = jnp.mean((x - mean) ** 2, axis=-1, keepdims=True)
    xn = (x - mean) / jnp.sqrt(var + eps) * gamma + beta
    h = jnp.maximum(xn @ w1 + b1, 0.0)
    return h @ w2 + b2 + x


if __name__ == "__main__":
    batch, seq, hidden, ff = 2, 8, 32, 64

    key = jax.random.PRNGKey(0)
    k_x, k_w1, k_b1, k_w2, k_b2, k_g, k_be = jax.random.split(key, 7)

    x = jax.random.normal(k_x, (batch, seq, hidden), dtype=jnp.float32)

    # Deterministic synthetic parameters (nn.Linear / nn.LayerNorm shapes).
    # nn.Linear(hidden, ff).weight is (ff, hidden); we store the transposed (hidden, ff).
    w1 = jax.random.normal(k_w1, (hidden, ff), dtype=jnp.float32) * 0.1
    b1 = jax.random.normal(k_b1, (ff,), dtype=jnp.float32) * 0.1
    w2 = jax.random.normal(k_w2, (ff, hidden), dtype=jnp.float32) * 0.1
    b2 = jax.random.normal(k_b2, (hidden,), dtype=jnp.float32) * 0.1
    gamma = jnp.ones((hidden,), dtype=jnp.float32) + 0.05 * jax.random.normal(
        k_g, (hidden,), dtype=jnp.float32)
    beta = 0.05 * jax.random.normal(k_be, (hidden,), dtype=jnp.float32)

    out = encoder_pwff(x, gamma, beta, w1, b1, w2, b2)
    out = jax.block_until_ready(out)

    ref = _reference(x, gamma, beta, w1, b1, w2, b2)
    assert out.shape == (batch, seq, hidden)
    err = float(jnp.max(jnp.abs(out - ref)))
    # bf16 MXU operands (f32 accumulation) -> looser tolerance vs. the all-f32 reference.
    assert jnp.allclose(out, ref, atol=2e-2, rtol=2e-2), f"max abs err {err}"

    print("KERNEL_OK")
</pallas_src>

<mosaic_0001>
module attributes {stable_mosaic.version = 11 : i64} {
  func.func @_pwff_kernel_fused(%arg0: i32, %arg1: memref<8x32xf32, #tpu.memory_space<vmem>>, %arg2: memref<1x32xf32, #tpu.memory_space<vmem>>, %arg3: memref<1x32xf32, #tpu.memory_space<vmem>>, %arg4: memref<32x64xbf16, #tpu.memory_space<vmem>>, %arg5: memref<1x64xf32, #tpu.memory_space<vmem>>, %arg6: memref<64x32xbf16, #tpu.memory_space<vmem>>, %arg7: memref<1x32xf32, #tpu.memory_space<vmem>>, %arg8: memref<8x32xf32, #tpu.memory_space<vmem>>) attributes {dimension_semantics = [#tpu.dimension_semantics<parallel>], iteration_bounds = array<i64: 2>, scalar_prefetch = 0 : i64, scratch_operands = 0 : i64, tpu.core_type = #tpu.core_type<tc>, window_params = [{transform_indices = @transform_0, window_bounds = array<i64: 8, 32>}, {pipeline_mode = #tpu.pipeline_mode<synchronous>, transform_indices = @transform_1, window_bounds = array<i64: 1, 32>}, {pipeline_mode = #tpu.pipeline_mode<synchronous>, transform_indices = @transform_2, window_bounds = array<i64: 1, 32>}, {pipeline_mode = #tpu.pipeline_mode<synchronous>, transform_indices = @transform_3, window_bounds = array<i64: 32, 64>}, {pipeline_mode = #tpu.pipeline_mode<synchronous>, transform_indices = @transform_4, window_bounds = array<i64: 1, 64>}, {pipeline_mode = #tpu.pipeline_mode<synchronous>, transform_indices = @transform_5, window_bounds = array<i64: 64, 32>}, {pipeline_mode = #tpu.pipeline_mode<synchronous>, transform_indices = @transform_6, window_bounds = array<i64: 1, 32>}, {transform_indices = @transform_7, window_bounds = array<i64: 8, 32>}]} {
    %c0 = arith.constant 0 : index
    %c0_0 = arith.constant 0 : index
    %0 = vector.load %arg1[%c0, %c0_0] : memref<8x32xf32, #tpu.memory_space<vmem>>, vector<8x32xf32>
    %cst = arith.constant dense<0.000000e+00> : vector<8xf32>
    %1 = vector.multi_reduction <add>, %0, %cst [1] : vector<8x32xf32> to vector<8xf32>
    %2 = vector.shape_cast %1 : vector<8xf32> to vector<8x1xf32>
    %cst_1 = arith.constant 3.200000e+01 : f32
    %3 = vector.broadcast %cst_1 : f32 to vector<8x1xf32>
    %4 = arith.divf %2, %3 : vector<8x1xf32>
    %5 = vector.broadcast %4 : vector<8x1xf32> to vector<8x32xf32>
    %6 = arith.subf %0, %5 : vector<8x32xf32>
    %7 = arith.mulf %6, %6 : vector<8x32xf32>
    %cst_2 = arith.constant dense<0.000000e+00> : vector<8xf32>
    %8 = vector.multi_reduction <add>, %7, %cst_2 [1] : vector<8x32xf32> to vector<8xf32>
    %9 = vector.shape_cast %8 : vector<8xf32> to vector<8x1xf32>
    %cst_3 = arith.constant 3.200000e+01 : f32
    %10 = vector.broadcast %cst_3 : f32 to vector<8x1xf32>
    %11 = arith.divf %9, %10 : vector<8x1xf32>
    %cst_4 = arith.constant 9.99999997E-7 : f32
    %12 = vector.broadcast %cst_4 : f32 to vector<8x1xf32>
    %13 = arith.addf %11, %12 : vector<8x1xf32>
    %14 = math.rsqrt %13 : vector<8x1xf32>
    %15 = vector.broadcast %14 : vector<8x1xf32> to vector<8x32xf32>
    %16 = arith.mulf %6, %15 : vector<8x32xf32>
    %c0_5 = arith.constant 0 : index
    %c0_6 = arith.constant 0 : index
    %17 = vector.load %arg2[%c0_5, %c0_6] : memref<1x32xf32, #tpu.memory_space<vmem>>, vector<1x32xf32>
    %18 = vector.broadcast %17 : vector<1x32xf32> to vector<8x32xf32>
    %19 = arith.mulf %16, %18 : vector<8x32xf32>
    %c0_7 = arith.constant 0 : index
    %c0_8 = arith.constant 0 : index
    %20 = vector.load %arg3[%c0_7, %c0_8] : memref<1x32xf32, #tpu.memory_space<vmem>>, vector<1x32xf32>
    %21 = vector.broadcast %20 : vector<1x32xf32> to vector<8x32xf32>
    %22 = arith.addf %19, %21 : vector<8x32xf32>
    %23 = arith.truncf %22 : vector<8x32xf32> to vector<8x32xbf16>
    %c0_9 = arith.constant 0 : index
    %c0_10 = arith.constant 0 : index
    %24 = vector.load %arg4[%c0_9, %c0_10] : memref<32x64xbf16, #tpu.memory_space<vmem>>, vector<32x64xbf16>
    %cst_11 = arith.constant dense<0.000000e+00> : vector<8x64xf32>
    %25 = tpu.matmul %23, %24, %cst_11 {dimension_numbers = #tpu.dot_dimension_numbers<[1], [0], [0], [1], [0, 0, 1, 1], [], []>} : vector<8x32xbf16>, vector<32x64xbf16>, vector<8x64xf32> -> vector<8x64xf32>
    %c0_12 = arith.constant 0 : index
    %c0_13 = arith.constant 0 : index
    %26 = vector.load %arg5[%c0_12, %c0_13] : memref<1x64xf32, #tpu.memory_space<vmem>>, vector<1x64xf32>
    %27 = vector.broadcast %26 : vector<1x64xf32> to vector<8x64xf32>
    %28 = arith.addf %25, %27 : vector<8x64xf32>
    %cst_14 = arith.constant 0.000000e+00 : f32
    %29 = vector.broadcast %cst_14 : f32 to vector<8x64xf32>
    %30 = arith.maximumf %28, %29 : vector<8x64xf32>
    %31 = arith.truncf %30 : vector<8x64xf32> to vector<8x64xbf16>
    %c0_15 = arith.constant 0 : index
    %c0_16 = arith.constant 0 : index
    %32 = vector.load %arg6[%c0_15, %c0_16] : memref<64x32xbf16, #tpu.memory_space<vmem>>, vector<64x32xbf16>
    %cst_17 = arith.constant dense<0.000000e+00> : vector<8x32xf32>
    %33 = tpu.matmul %31, %32, %cst_17 {dimension_numbers = #tpu.dot_dimension_numbers<[1], [0], [0], [1], [0, 0, 1, 1], [], []>} : vector<8x64xbf16>, vector<64x32xbf16>, vector<8x32xf32> -> vector<8x32xf32>
    %c0_18 = arith.constant 0 : index
    %c0_19 = arith.constant 0 : index
    %34 = vector.load %arg7[%c0_18, %c0_19] : memref<1x32xf32, #tpu.memory_space<vmem>>, vector<1x32xf32>
    %35 = vector.broadcast %34 : vector<1x32xf32> to vector<8x32xf32>
    %36 = arith.addf %33, %35 : vector<8x32xf32>
    %37 = arith.addf %36, %0 : vector<8x32xf32>
    %c0_20 = arith.constant 0 : index
    %c0_21 = arith.constant 0 : index
    %38 = vector.load %arg8[%c0_20, %c0_21] : memref<8x32xf32, #tpu.memory_space<vmem>>, vector<8x32xf32>
    tpu.vector_store %arg8[%c0_20, %c0_21], %37 {strides = array<i32>} : memref<8x32xf32, #tpu.memory_space<vmem>>, vector<8x32xf32>,
    return
  }
  func.func @transform_0(%arg0: i32) -> (i32, i32) {
    %c0_i32 = arith.constant 0 : i32
    %c0_i32_0 = arith.constant 0 : i32
    return %arg0, %c0_i32 : i32, i32
  }
  func.func @transform_1(%arg0: i32) -> (i32, i32) {
    %c0_i32 = arith.constant 0 : i32
    %c0_i32_0 = arith.constant 0 : i32
    %c0_i32_1 = arith.constant 0 : i32
    return %c0_i32, %c0_i32_0 : i32, i32
  }
  func.func @transform_2(%arg0: i32) -> (i32, i32) {
    %c0_i32 = arith.constant 0 : i32
    %c0_i32_0 = arith.constant 0 : i32
    %c0_i32_1 = arith.constant 0 : i32
    return %c0_i32, %c0_i32_0 : i32, i32
  }
  func.func @transform_3(%arg0: i32) -> (i32, i32) {
    %c0_i32 = arith.constant 0 : i32
    %c0_i32_0 = arith.constant 0 : i32
    %c0_i32_1 = arith.constant 0 : i32
    return %c0_i32, %c0_i32_0 : i32, i32
  }
  func.func @transform_4(%arg0: i32) -> (i32, i32) {
    %c0_i32 = arith.constant 0 : i32
    %c0_i32_0 = arith.constant 0 : i32
    %c0_i32_1 = arith.constant 0 : i32
    return %c0_i32, %c0_i32_0 : i32, i32
  }
  func.func @transform_5(%arg0: i32) -> (i32, i32) {
    %c0_i32 = arith.constant 0 : i32
    %c0_i32_0 = arith.constant 0 : i32
    %c0_i32_1 = arith.constant 0 : i32
    return %c0_i32, %c0_i32_0 : i32, i32
  }
  func.func @transform_6(%arg0: i32) -> (i32, i32) {
    %c0_i32 = arith.constant 0 : i32
    %c0_i32_0 = arith.constant 0 : i32
    %c0_i32_1 = arith.constant 0 : i32
    return %c0_i32, %c0_i32_0 : i32, i32
  }
  func.func @transform_7(%arg0: i32) -> (i32, i32) {
    %c0_i32 = arith.constant 0 : i32
    %c0_i32_0 = arith.constant 0 : i32
    return %arg0, %c0_i32 : i32, i32
  }
}

</mosaic_0001>

<llo_original>
// kernel: tpu_custom_call.1
$region0: #{tpu_custom_call.1}
  #allocation0 [shape = 'u32[]', space=smem, size = 0x4, offset = 0x4, fixed_abs, tag = 'smem constant byte address 0x4 - core index']
  #allocation1 [shape = 'u32[72,128]{1,0:T(1,128)}', space=vmem, size = 0x9000, scoped, tag = 'internal scratch']
  %s0 = inlined_call_operand.vmem [shape: f32[16,32], index: 0, kind: input, shape index: {}]
  %s1 = inlined_call_operand.vmem [shape: f32[1,32], index: 1, kind: input, shape index: {}]
  %s2 = inlined_call_operand.vmem [shape: f32[1,32], index: 2, kind: input, shape index: {}]
  %s3 = inlined_call_operand.vmem [shape: bf16[32,64], index: 3, kind: input, shape index: {}]
  %s4 = inlined_call_operand.vmem [shape: f32[1,64], index: 4, kind: input, shape index: {}]
  %s5 = inlined_call_operand.vmem [shape: bf16[64,32], index: 5, kind: input, shape index: {}]
  %s6 = inlined_call_operand.vmem [shape: f32[1,32], index: 6, kind: input, shape index: {}]
  %s7 = inlined_call_operand.hbm [shape: f32[16,32], index: 7, kind: output, shape index: {}]
  %s8 = sld [smem:[#allocation0]]
  $region61: #{tpu_custom_call.1} parent=0
    _
  %s10 = ssub.s32 1, %s8
  %s11 = scalar_select 0, %s10, %s8
  $region1: #{tpu_custom_call.1} parent=0
    #allocation2 [shape = 'u8[8192]{0}', space=vmem, size = 0x2000, scoped, tag = 'output window, operand 0']
    #allocation3 [shape = 's32[2]{0}', space=sflag, size = 0x8, scoped, tag = 'scoped memory for tpu_custom_call.1']
    %12 = vsyncpa [#allocation3], 0
    %s13 = scalar_lea.sflag [#allocation3], 1
    %14 = vsyncpa %s13, 0
    loop: start=0, step=1, limit=4
    $region2: #{tpu_custom_call.1} parent=1 // loop_pre_header
      _
    $region3: #{tpu_custom_call.1} parent=1 // loop_header
      %s16 = sphi 0, %s20
      %p17 = scmp.ge.s32.totalorder %s16, 4
      %s26 = sphi 0, %s28
      %s29 = sphi 0, %s26
      %s30 = sphi 0, %s29
      %s46 = sphi 0, %s30
      %s50 = sphi 0, %s50
      %s52 = sphi 0, %s50
      %s53 = sphi 0, %s52
      %s67 = sphi 0, %s53
      %s71 = sphi 0, %s71
      %s73 = sphi 0, %s71
      %s74 = sphi 0, %s73
      %s88 = sphi 0, %s74
      %s92 = sphi 0, %s92
      %s94 = sphi 0, %s92
      %s95 = sphi 0, %s94
      %s109 = sphi 0, %s95
      %s113 = sphi 0, %s113
      %s115 = sphi 0, %s113
      %s116 = sphi 0, %s115
      %s130 = sphi 0, %s116
      %s134 = sphi 0, %s134
      %s136 = sphi 0, %s134
      %s137 = sphi 0, %s136
      %s151 = sphi 0, %s137
      %s155 = sphi 0, %s155
      %s157 = sphi 0, %s155
      %s158 = sphi 0, %s157
      %s172 = sphi 0, %s158
      %s178 = sphi 0, %s180
      %s181 = sphi 0, %s178
      %s182 = sphi 0, %s181
      %s198 = sphi 0, %s182
    $region4: #{tpu_custom_call.1} parent=1 // loop_header_branch
      %19 = sbr.rel (%p17) target = $region8
    $region5: #{tpu_custom_call.1} parent=1 // loop_body
      %s21 = ssub.s32 %s16, 1
      %s22 = ssub.s32 %s16, 2
      %s23 = sadd.s32 %s16, 1
      %s24 = ssub.s32 %s16, %s23
      %p25 = scmp.eq.s32.totalorder %s24, 0
      %s27 = sadd.s32 %s26, 1
      %s28 = scalar_select %p25, %s26, %s27
      %p31 = pneg %p25
      %p32 = scmp.eq.s32.totalorder %s16, 1
      %p33 = por %p31, %p32
      %p34 = scmp.ne.s32.totalorder %s26, %s29
      %p35 = scmp.eq.s32.totalorder %s16, 0
      %p36 = por %p34, %p35
      %p37 = scmp.ne.s32.totalorder %s26, %s29
      %p38 = scmp.eq.s32.totalorder %s21, 1
      %p39 = por %p37, %p38
      %p40 = scmp.ne.s32.totalorder %s29, %s30
      %p41 = scmp.eq.s32.totalorder %s21, 0
      %p42 = por %p40, %p41
      %p43 = scmp.ne.s32.totalorder %s29, %s30
      %p44 = scmp.eq.s32.totalorder %s22, 1
      %p45 = por %p43, %p44
      %p47 = scmp.ne.s32.totalorder %s30, %s46
      %p48 = scmp.eq.s32.totalorder %s22, 0
      %p49 = por %p47, %p48
      %s51 = sadd.s32 %s50, 1
      %p54 = scmp.eq.s32.totalorder %s16, 1
      %p55 = scmp.ne.s32.totalorder %s50, %s52
      %p56 = scmp.eq.s32.totalorder %s16, 0
      %p57 = por %p55, %p56
      %p58 = scmp.ne.s32.totalorder %s50, %s52
      %p59 = scmp.eq.s32.totalorder %s21, 1
      %p60 = por %p58, %p59
      %p61 = scmp.ne.s32.totalorder %s52, %s53
      %p62 = scmp.eq.s32.totalorder %s21, 0
      %p63 = por %p61, %p62
      %p64 = scmp.ne.s32.totalorder %s52, %s53
      %p65 = scmp.eq.s32.totalorder %s22, 1
      %p66 = por %p64, %p65
      %p68 = scmp.ne.s32.totalorder %s53, %s67
      %p69 = scmp.eq.s32.totalorder %s22, 0
      %p70 = por %p68, %p69
      %s72 = sadd.s32 %s71, 1
      %p75 = scmp.eq.s32.totalorder %s16, 1
      %p76 = scmp.ne.s32.totalorder %s71, %s73
      %p77 = scmp.eq.s32.totalorder %s16, 0
      %p78 = por %p76, %p77
      %p79 = scmp.ne.s32.totalorder %s71, %s73
      %p80 = scmp.eq.s32.totalorder %s21, 1
      %p81 = por %p79, %p80
      %p82 = scmp.ne.s32.totalorder %s73, %s74
      %p83 = scmp.eq.s32.totalorder %s21, 0
      %p84 = por %p82, %p83
      %p85 = scmp.ne.s32.totalorder %s73, %s74
      %p86 = scmp.eq.s32.totalorder %s22, 1
      %p87 = por %p85, %p86
      %p89 = scmp.ne.s32.totalorder %s74, %s88
      %p90 = scmp.eq.s32.totalorder %s22, 0
      %p91 = por %p89, %p90
      %s93 = sadd.s32 %s92, 1
      %p96 = scmp.eq.s32.totalorder %s16, 1
      %p97 = scmp.ne.s32.totalorder %s92, %s94
      %p98 = scmp.eq.s32.totalorder %s16, 0
      %p99 = por %p97, %p98
      %p100 = scmp.ne.s32.totalorder %s92, %s94
      %p101 = scmp.eq.s32.totalorder %s21, 1
      %p102 = por %p100, %p101
      %p103 = scmp.ne.s32.totalorder %s94, %s95
      %p104 = scmp.eq.s32.totalorder %s21, 0
      %p105 = por %p103, %p104
      %p106 = scmp.ne.s32.totalorder %s94, %s95
      %p107 = scmp.eq.s32.totalorder %s22, 1
      %p108 = por %p106, %p107
      %p110 = scmp.ne.s32.totalorder %s95, %s109
      %p111 = scmp.eq.s32.totalorder %s22, 0
      %p112 = por %p110, %p111
      %s114 = sadd.s32 %s113, 1
      %p117 = scmp.eq.s32.totalorder %s16, 1
      %p118 = scmp.ne.s32.totalorder %s113, %s115
      %p119 = scmp.eq.s32.totalorder %s16, 0
      %p120 = por %p118, %p119
      %p121 = scmp.ne.s32.totalorder %s113, %s115
      %p122 = scmp.eq.s32.totalorder %s21, 1
      %p123 = por %p121, %p122
      %p124 = scmp.ne.s32.totalorder %s115, %s116
      %p125 = scmp.eq.s32.totalorder %s21, 0
      %p126 = por %p124, %p125
      %p127 = scmp.ne.s32.totalorder %s115, %s116
      %p128 = scmp.eq.s32.totalorder %s22, 1
      %p129 = por %p127, %p128
      %p131 = scmp.ne.s32.totalorder %s116, %s130
      %p132 = scmp.eq.s32.totalorder %s22, 0
      %p133 = por %p131, %p132
      %s135 = sadd.s32 %s134, 1
      %p138 = scmp.eq.s32.totalorder %s16, 1
      %p139 = scmp.ne.s32.totalorder %s134, %s136
      %p140 = scmp.eq.s32.totalorder %s16, 0
      %p141 = por %p139, %p140
      %p142 = scmp.ne.s32.totalorder %s134, %s136
      %p143 = scmp.eq.s32.totalorder %s21, 1
      %p144 = por %p142, %p143
      %p145 = scmp.ne.s32.totalorder %s136, %s137
      %p146 = scmp.eq.s32.totalorder %s21, 0
      %p147 = por %p145, %p146
      %p148 = scmp.ne.s32.totalorder %s136, %s137
      %p149 = scmp.eq.s32.totalorder %s22, 1
      %p150 = por %p148, %p149
      %p152 = scmp.ne.s32.totalorder %s137, %s151
      %p153 = scmp.eq.s32.totalorder %s22, 0
      %p154 = por %p152, %p153
      %s156 = sadd.s32 %s155, 1
      %p159 = scmp.eq.s32.totalorder %s16, 1
      %p160 = scmp.ne.s32.totalorder %s155, %s157
      %p161 = scmp.eq.s32.totalorder %s16, 0
      %p162 = por %p160, %p161
      %p163 = scmp.ne.s32.totalorder %s155, %s157
      %p164 = scmp.eq.s32.totalorder %s21, 1
      %p165 = por %p163, %p164
      %p166 = scmp.ne.s32.totalorder %s157, %s158
      %p167 = scmp.eq.s32.totalorder %s21, 0
      %p168 = por %p166, %p167
      %p169 = scmp.ne.s32.totalorder %s157, %s158
      %p170 = scmp.eq.s32.totalorder %s22, 1
      %p171 = por %p169, %p170
      %p173 = scmp.ne.s32.totalorder %s158, %s172
      %p174 = scmp.eq.s32.totalorder %s22, 0
      %p175 = por %p173, %p174
      %s176 = ssub.s32 %s16, %s23
      %p177 = scmp.eq.s32.totalorder %s176, 0
      %s179 = sadd.s32 %s178, 1
      %s180 = scalar_select %p177, %s178, %s179
      %p183 = pneg %p177
      %p184 = scmp.eq.s32.totalorder %s16, 1
      %p185 = por %p183, %p184
      %p186 = scmp.ne.s32.totalorder %s178, %s181
      %p187 = scmp.eq.s32.totalorder %s16, 0
      %p188 = por %p186, %p187
      %p189 = scmp.ne.s32.totalorder %s178, %s181
      %p190 = scmp.eq.s32.totalorder %s21, 1
      %p191 = por %p189, %p190
      %p192 = scmp.ne.s32.totalorder %s181, %s182
      %p193 = scmp.eq.s32.totalorder %s21, 0
      %p194 = por %p192, %p193
      %p195 = scmp.ne.s32.totalorder %s181, %s182
      %p196 = scmp.eq.s32.totalorder %s22, 1
      %p197 = por %p195, %p196
      %p199 = scmp.ne.s32.totalorder %s182, %s198
      %p200 = scmp.eq.s32.totalorder %s22, 0
      %p201 = por %p199, %p200
      %p202 = scmp.le.s32.totalorder 1, %s16
      %p203 = scmp.lt.s32.totalorder %s16, 3
      %p204 = pnand %p202, %p203
      %p205 = pneg %p204
      // Predicated region
      $region9: #{tpu_custom_call.1} parent=5 // pred_check
        _
      $region10: #{tpu_custom_call.1} parent=5 // pred_check_branch
        %207 = sbr.rel (%p204) target = $region12
      $region11: #{tpu_custom_call.1} parent=5 // pred_region
        %s208 = ssub.s32 %s16, 1
        // Predicated region
        $region13: #{tpu_custom_call.1} parent=11 // pred_check
          %p209 = pneg %p63
        $region14: #{tpu_custom_call.1} parent=11 // pred_check_branch
          %211 = sbr.rel (%p209) target = $region16
        $region15: #{tpu_custom_call.1} parent=11 // pred_region
          _
        $region16: #{tpu_custom_call.1} parent=11 // pred_fallthru
          _
        // Predicated region
        $region17: #{tpu_custom_call.1} parent=11 // pred_check
          %p212 = pneg %p84
        $region18: #{tpu_custom_call.1} parent=11 // pred_check_branch
          %214 = sbr.rel (%p212) target = $region20
        $region19: #{tpu_custom_call.1} parent=11 // pred_region
          _
        $region20: #{tpu_custom_call.1} parent=11 // pred_fallthru
          _
        // Predicated region
        $region21: #{tpu_custom_call.1} parent=11 // pred_check
          %p215 = pneg %p105
        $region22: #{tpu_custom_call.1} parent=11 // pred_check_branch
          %217 = sbr.rel (%p215) target = $region24
        $region23: #{tpu_custom_call.1} parent=11 // pred_region
          _
        $region24: #{tpu_custom_call.1} parent=11 // pred_fallthru
          _
        // Predicated region
        $region25: #{tpu_custom_call.1} parent=11 // pred_check
          %p218 = pneg %p126
        $region26: #{tpu_custom_call.1} parent=11 // pred_check_branch
          %220 = sbr.rel (%p218) target = $region28
        $region27: #{tpu_custom_call.1} parent=11 // pred_region
          _
        $region28: #{tpu_custom_call.1} parent=11 // pred_fallthru
          _
        // Predicated region
        $region29: #{tpu_custom_call.1} parent=11 // pred_check
          %p221 = pneg %p147
        $region30: #{tpu_custom_call.1} parent=11 // pred_check_branch
          %223 = sbr.rel (%p221) target = $region32
        $region31: #{tpu_custom_call.1} parent=11 // pred_region
          _
        $region32: #{tpu_custom_call.1} parent=11 // pred_fallthru
          _
        // Predicated region
        $region33: #{tpu_custom_call.1} parent=11 // pred_check
          %p224 = pneg %p168
        $region34: #{tpu_custom_call.1} parent=11 // pred_check_branch
          %226 = sbr.rel (%p224) target = $region36
        $region35: #{tpu_custom_call.1} parent=11 // pred_region
          _
        $region36: #{tpu_custom_call.1} parent=11 // pred_fallthru
          _
      $region12: #{tpu_custom_call.1} parent=5 // pred_fallthru
        _
      %p227 = scmp.lt.s32.totalorder %s16, 2
      // Predicated region
      $region37: #{tpu_custom_call.1} parent=5 // pred_check
        %p228 = pneg %p227
      $region38: #{tpu_custom_call.1} parent=5 // pred_check_branch
        %230 = sbr.rel (%p228) target = $region40
      $region39: #{tpu_custom_call.1} parent=5 // pred_region
        // Predicated region
        $region41: #{tpu_custom_call.1} parent=39 // pred_check
          %p231 = pneg %p36
        $region42: #{tpu_custom_call.1} parent=39 // pred_check_branch
          %233 = sbr.rel (%p231) target = $region44
        $region43: #{tpu_custom_call.1} parent=39 // pred_region
          %p234 = scmp.lt.s32.totalorder %s16, 1
          %s235 = scalar_select %p234, %s16, 1
          %s236 = smul.addr %s235, 8
          %s237 = scalar_lea.vmem %s0, %s236
        $region44: #{tpu_custom_call.1} parent=39 // pred_fallthru
          _
      $region40: #{tpu_custom_call.1} parent=5 // pred_fallthru
        _
      %p238 = scmp.le.s32.totalorder 1, %s16
      %p239 = scmp.lt.s32.totalorder %s16, 3
      %p240 = pnand %p238, %p239
      %p241 = pneg %p240
      // Predicated region
      $region45: #{tpu_custom_call.1} parent=5 // pred_check
        _
      $region46: #{tpu_custom_call.1} parent=5 // pred_check_branch
        %243 = sbr.rel (%p240) target = $region48
      $region47: #{tpu_custom_call.1} parent=5 // pred_region
        %s244 = ssub.s32 %s16, 1
        %p245 = scmp.lt.s32.totalorder %s21, 1
        %s246 = scalar_select %p245, %s21, 1
        %s247 = smul.addr %s246, 8
        %s248 = scalar_lea.vmem %s0, %s247
        %p249 = pneg %p42
        %p250 = pneg %p39
        %p251 = pneg %p63
        %p252 = pneg %p60
        %p253 = pneg %p84
        %p254 = pneg %p81
        %p255 = pneg %p105
        %p256 = pneg %p102
        %p257 = pneg %p126
        %p258 = pneg %p123
        %p259 = pneg %p147
        %p260 = pneg %p144
        %p261 = pneg %p168
        %p262 = pneg %p165
        %p263 = pneg %p194
        %p264 = pneg %p191
        %s265 = sand.u32 %s181, 1
        %s266 = scalar_lea.sflag [#allocation3], %s265
        %s267 = sand.u32 %s181, 1
        %s268 = smul.addr %s267, 8
        %s269 = scalar_lea.vmem [#allocation2], %s268
        %p270 = scmp.lt.s32.totalorder %s21, 1
        %s271 = scalar_select %p270, %s21, 1
        %s272 = smul.addr %s271, 8
        %s273 = scalar_lea.vmem %s0, %s272
        %v275 = vld [vmem:[%s273] sm:$0xff]
        %vm276 = vcmask 261120
        %v277 = vsel %vm276, %v275, 0.0
        %278 = vadd.xlane.f32.xlu0 %v277
        %v279 = vpop.xlane.xlu0 %278
        %v280 = vrcp.pop 32.0
        %v281 = vmul.f32 32.0, %v280
        %v282 = vsub.f32 1.0, %v281
        %v283 = vmul.f32 %v280, %v282
        %v284 = vadd.f32 %v280, %v283
        %vm285 = vweird.f32 %v280
        %v286 = vsel %vm285, %v280, %v284
        %v287 = vmul.f32 %v279, %v286
        %v288 = vsub.f32 %v275, %v287
        %v289 = vmul.f32 %v288, %v288
        %v290 = vsel %vm276, %v289, 0.0
        %291 = vadd.xlane.f32.xlu0 %v290
        %v292 = vpop.xlane.xlu0 %291
        %v293 = vmul.f32 %v292, %v286
        %v294 = vadd.f32 %v293, 1e-06
        %v295 = vrsqrt.pop %v294
        %v296 = vmul.f32 %v295, %v294
        %v297 = vmul.f32 %v296, %v295
        %v298 = vmul.f32 0.5, %v297
        %v299 = vsub.f32 1.5, %v298
        %v300 = vmul.f32 %v295, %v299
        %vm301 = vweird.f32 %v294
        %vm302 = vweird.f32 %v295
        %vm303 = vmor %vm301, %vm302
        %v304 = vsel %vm303, %v295, %v300
        %v305 = vmul.f32 %v288, %v304
        %v306 = vld [vmem:[%s1] sm:$0x1]
        %v308 = vperm.slane %v306, 0
        %v310 = vmul.f32 %v305, %v308
        %v311 = vld [vmem:[%s2] sm:$0x1]
        %v313 = vperm.slane %v311, 0
        %v315 = vadd.f32 %v310, %v313
        %v316 = vpack.c.bf16 %v315, %v315
        %v317 = vld [vmem:[%s3] sm:$0xf]
        %v318 = vld [vmem:[%s3 + $0x4] sm:$0xf]
        %v319 = vld [vmem:[%s3 + $0x8] sm:$0xf]
        %v320 = vld [vmem:[%s3 + $0xc] sm:$0xf]
        %v321 = vld [vmem:[%s4] sm:$0x1]
        %v323 = vperm.slane %v321, 0
        %v329 = vunpack.c.l.b16 %v317
        %v330 = vunpack.c.l.b16 %v318
        %v331 = vunpack.c.l.b16 %v319
        %v332 = vunpack.c.l.b16 %v320
        %v333 = vpack.c.b16 %v330, %v329
        %v334 = vpack.c.b16 %v332, %v331
        %v338 = vsel %vm276, %v316, 0
        %340 = vmatpush.bf16.msra.mxu0 0
        %341 = vmatpush.bf16.msra.mxu0 0
        %342 = vmatpush.bf16.msra.mxu0 0
        %343 = vmatpush.bf16.msra.mxu0 0
        %344 = vmatpush.bf16.msra.mxu0 0
        %345 = vmatpush.bf16.msra.mxu0 0
        %346 = vmatpush.bf16.msra.mxu0 %v334
        %347 = vmatpush.bf16.msra.mxu0 %v333
        %348 = vmatmul.bf16.gmra.mxu0 %v338
        %v349 = vpop.f32.mrf.mxu0
        %v350 = vadd.f32 %v323, %v349
        %v351 = vpop.f32.mrf.mxu0
        %352 = vdwg.mxu0
        %v353 = vmax.f32 %v350, 0.0
        %v354 = vpack.c.bf16 %v353, %v353
        %v355 = vld [vmem:[%s5] sm:$0xf]
        %v356 = vld [vmem:[%s5 + $0x4] sm:$0xf]
        %v357 = vld [vmem:[%s5 + $0x8] sm:$0xf]
        %v358 = vld [vmem:[%s5 + $0xc] sm:$0xf]
        %v359 = vld [vmem:[%s5 + $0x10] sm:$0xf]
        %v360 = vld [vmem:[%s5 + $0x14] sm:$0xf]
        %v361 = vld [vmem:[%s5 + $0x18] sm:$0xf]
        %v362 = vld [vmem:[%s5 + $0x1c] sm:$0xf]
        %v363 = vld [vmem:[%s6] sm:$0x1]
        %v365 = vperm.slane %v363, 0
        %v375 = vunpack.c.l.b16 %v355
        %v376 = vunpack.c.l.b16 %v356
        %v377 = vunpack.c.l.b16 %v357
        %v378 = vunpack.c.l.b16 %v358
        %v379 = vunpack.c.l.b16 %v359
        %v380 = vunpack.c.l.b16 %v360
        %v381 = vunpack.c.l.b16 %v361
        %v382 = vunpack.c.l.b16 %v362
        %v383 = vpack.c.b16 %v376, %v375
        %v384 = vpack.c.b16 %v378, %v377
        %v385 = vpack.c.b16 %v380, %v379
        %v386 = vpack.c.b16 %v382, %v381
        %vm391 = vcmask 523264
        %v393 = vsel %vm391, %v354, 0
        %395 = vmatpush.bf16.msra.mxu0 0
        %396 = vmatpush.bf16.msra.mxu0 0
        %397 = vmatpush.bf16.msra.mxu0 0
        %398 = vmatpush.bf16.msra.mxu0 0
        %399 = vmatpush.bf16.msra.mxu0 %v386
        %400 = vmatpush.bf16.msra.mxu0 %v385
        %401 = vmatpush.bf16.msra.mxu0 %v384
        %402 = vmatpush.bf16.msra.mxu0 %v383
        %403 = vmatmul.bf16.gmra.mxu0 %v393
        %v404 = vpop.f32.mrf.mxu0
        %v405 = vadd.f32 %v365, %v404
        %v406 = vpop.f32.mrf.mxu0
        %407 = vdwg.mxu0
        %v408 = vadd.f32 %v405, %v275
        %409 = vst.msk [vmem:[%s269] sm:$0xff] %vm276, %v408
        %s410 = sand.u32 %s181, 1
        %s411 = scalar_lea.sflag [#allocation3], %s410
        %s412 = sand.u32 %s181, 1
        %s413 = smul.addr %s412, 8
        %s414 = scalar_lea.vmem [#allocation2], %s413
        // Predicated region
        $region49: #{tpu_custom_call.1} parent=47 // pred_check
          %p415 = pneg %p191
        $region50: #{tpu_custom_call.1} parent=47 // pred_check_branch
          %417 = sbr.rel (%p415) target = $region52
        $region51: #{tpu_custom_call.1} parent=47 // pred_region
          %419 = vsyncadd %s411, 0
          %s420 = smul.addr %s21, 8
          %s421 = scalar_lea.hbm %s7, %s420
          %s423 = sshll.u32 %s414, 4
          %s424 = int_to_ptr.vmem [resolvable:$true] %s423
          %s425 = sshll.u32 %s421, 4
          %s426 = int_to_ptr.hbm [resolvable:$true] %s425
          %428 = dma.vmem_to_hbm [thread:$0]  %s424, 128, %s426, %s411
        $region52: #{tpu_custom_call.1} parent=47 // pred_fallthru
          _
      $region48: #{tpu_custom_call.1} parent=5 // pred_fallthru
        _
      %p429 = scmp.le.s32.totalorder 2, %s16
      // Predicated region
      $region53: #{tpu_custom_call.1} parent=5 // pred_check
        %p430 = pneg %p429
      $region54: #{tpu_custom_call.1} parent=5 // pred_check_branch
        %432 = sbr.rel (%p430) target = $region56
      $region55: #{tpu_custom_call.1} parent=5 // pred_region
        %s433 = ssub.s32 %s16, 2
        // Predicated region
        $region57: #{tpu_custom_call.1} parent=55 // pred_check
          %p434 = pneg %p197
        $region58: #{tpu_custom_call.1} parent=55 // pred_check_branch
          %436 = sbr.rel (%p434) target = $region60
        $region59: #{tpu_custom_call.1} parent=55 // pred_region
          %s437 = sand.u32 %s182, 1
          %s438 = scalar_lea.sflag [#allocation3], %s437
          %s439 = sand.u32 %s182, 1
          %s440 = smul.addr %s439, 8
          %s441 = scalar_lea.vmem [#allocation2], %s440
          %443 = dma.done %s438, 128
        $region60: #{tpu_custom_call.1} parent=55 // pred_fallthru
          _
      $region56: #{tpu_custom_call.1} parent=5 // pred_fallthru
        _
    $region6: #{tpu_custom_call.1} parent=1 // loop_footer
      %s20 = sadd.s32 1, %s16
    $region7: #{tpu_custom_call.1} parent=1 // loop_footer_branch
      %15 = sbr.rel target = $region3
    $region8: #{tpu_custom_call.1} parent=1 // loop_exit
      _
    %444 = vsyncpa [#allocation3], 1
    %s445 = scalar_lea.sflag [#allocation3], 1
    %446 = vsyncpa %s445, 1

</llo_original>
